<compile_context>
chip_gen: v6e
topology: v6e:2x2x1
jax: 0.10.0
libtpu: 0.0.40
codegen_flags: <defaults>
</compile_context>

<pallas_src>
import functools

import jax
import jax.numpy as jnp
from jax import lax
from jax.experimental import pallas as pl
from jax.experimental.pallas import tpu as pltpu

_EPS = 1e-5  # nn.BatchNorm2d default


# --------------------------------------------------------------------------- #
# Kernels
# --------------------------------------------------------------------------- #
def _pass1_kernel(x_ref, bd1_ref, y_ref, st_ref, *, cdt):
    """Conv2d 1x1 as one block-diagonal MXU matmul + per-tile BN1 partial stats."""
    y = jnp.dot(x_ref[...].astype(cdt), bd1_ref[...],
                preferred_element_type=jnp.float32)
    y_ref[...] = y.astype(y_ref.dtype)
    # Per-tile partial sums (f32); wrapper groups the W lane-columns per channel.
    # (Micro-opt per review: could be ones(1, tm) @ y on the MXU if XLU-bound.)
    st_ref[0, 0:1, :] = jnp.sum(y, axis=0, keepdims=True)
    st_ref[0, 1:2, :] = jnp.sum(y * y, axis=0, keepdims=True)


def _pass2_kernel(y_ref, sc1_ref, sh1_ref, bands_ref, z_ref, st_ref, *, h, cdt):
    """BN1 + ReLU + 3x3 conv via 3 block-banded matmuls + per-tile BN2 stats."""
    tm = y_ref.shape[0]
    y = jnp.maximum(y_ref[...].astype(jnp.float32) * sc1_ref[...] + sh1_ref[...],
                    0.0)                                   # BN1 affine + ReLU (f32)

    # Vertical-boundary masks only (horizontal padding is inside the banded
    # weights). Tiles are image-aligned so the in-tile roll wrap lands exactly
    # on masked rows -- no halo needed.
    hh = lax.broadcasted_iota(jnp.int32, (tm, 1), 0) % h
    m_top = (hh > 0).astype(jnp.float32)       # output row has a row above it
    m_bot = (hh < h - 1).astype(jnp.float32)   # output row has a row below it

    # di = 1 (same row), di = 0 (row above), di = 2 (row below)
    acc = jnp.dot(y.astype(cdt), bands_ref[1], preferred_element_type=jnp.float32)
    t0 = pltpu.roll(y, shift=1, axis=0) * m_top            # t0[r] = y[r-1]
    acc = acc + jnp.dot(t0.astype(cdt), bands_ref[0],
                        preferred_element_type=jnp.float32)
    t2 = pltpu.roll(y, shift=tm - 1, axis=0) * m_bot        # t2[r] = y[r+1]
    acc = acc + jnp.dot(t2.astype(cdt), bands_ref[2],
                        preferred_element_type=jnp.float32)

    z_ref[...] = acc.astype(z_ref.dtype)
    st_ref[0, 0:1, :] = jnp.sum(acc, axis=0, keepdims=True)
    st_ref[0, 1:2, :] = jnp.sum(acc * acc, axis=0, keepdims=True)


def _pass3_kernel(*refs, res):
    """BN2 affine (+ residual add + ReLU)."""
    if res:
        z_ref, x_ref, sc2_ref, sh2_ref, o_ref = refs
    else:
        z_ref, sc2_ref, sh2_ref, o_ref = refs
    z = z_ref[...].astype(jnp.float32) * sc2_ref[...] + sh2_ref[...]
    if res:
        z = jnp.maximum(z + x_ref[...], 0.0)
    o_ref[...] = z.astype(o_ref.dtype)


# --------------------------------------------------------------------------- #
# Weight / stat folding helpers (tiny, wrapper-side)
# --------------------------------------------------------------------------- #
def _block_diag(w_small, width):
    """(Ci, Co) -> (W*Ci, W*Co): one copy of w_small per pixel column."""
    ci, co = w_small.shape
    eye = jnp.eye(width, dtype=jnp.float32)
    return jnp.einsum("uv,io->uivo", eye, w_small.astype(jnp.float32)
                      ).reshape(width * ci, width * co)


def _banded(w2_hwio, width, di):
    """Fuse the 3 horizontal taps of vertical tap `di` into one block tri-diagonal
    (W*Ci, W*Co) matrix: block (in-col u, out-col v) = w2[di, u - v + 1]."""
    ci, co = w2_hwio.shape[2], w2_hwio.shape[3]
    u = jnp.arange(width)[:, None]
    v = jnp.arange(width)[None, :]
    mat = jnp.zeros((width * ci, width * co), jnp.float32)
    for dj in range(3):
        sel = (u - v == dj - 1).astype(jnp.float32)
        mat = mat + jnp.einsum("uv,io->uivo", sel,
                               w2_hwio[di, dj].astype(jnp.float32)
                               ).reshape(width * ci, width * co)
    return mat


def _bn_affine(stats, gamma, beta, width, cout, count):
    """Reduce per-tile (sum, sumsq) partials -> per-channel scale/shift, folded
    back onto the lane layout (lane = col*Cout + c)."""
    tot = jnp.sum(stats, axis=0)                    # (2, W*Cout)
    tot = tot.reshape(2, width, cout).sum(axis=1)   # (2, Cout)
    mean = tot[0] / count
    var = tot[1] / count - mean * mean              # biased (train-mode) variance
    scale = gamma.reshape(-1) * lax.rsqrt(var + _EPS)
    shift = beta.reshape(-1) - mean * scale
    scale_l = jnp.tile(scale.reshape(1, cout), (1, width))   # (1, W*Cout)
    shift_l = jnp.tile(shift.reshape(1, cout), (1, width))
    return scale_l, shift_l


def _pick_tile_rows(n, h, target_rows=1024):
    """Largest image-aligned row tile <= target (M >= 256 sublanes per matmul
    when the batch allows it)."""
    imgs = 1
    for d in range(1, n + 1):
        if n % d == 0 and d * h <= target_rows:
            imgs = d
    return imgs * h


# --------------------------------------------------------------------------- #
# Forward pass
# --------------------------------------------------------------------------- #
def block_forward_folded(x2d, params, *, n, h, w, res=True,
                         compute_dtype=jnp.bfloat16, tile_rows=None):
    """Forward on the lane-dense folded layout. x2d: (N*H, W*Cin) float32."""
    cin = x2d.shape[1] // w
    cout = params["w1"].shape[1]
    rows = n * h
    wc = w * cout
    if res:
        assert cin == cout, "residual path requires in_channels == out_channels"
    if tile_rows is None:
        tile_rows = _pick_tile_rows(n, h)
    assert tile_rows % h == 0 and rows % tile_rows == 0, "tiles must be image-aligned"
    assert tile_rows % 8 == 0, "row tile must be a multiple of 8 sublanes"
    nt = rows // tile_rows
    cdt = compute_dtype

    # Fold weights once (tiny).  bd1: block-diagonal 1x1 conv; bands: 3 banded
    # matrices (vertical taps), horizontal taps + horizontal padding baked in.
    bd1 = _block_diag(params["w1"], w).astype(cdt)                # (W*Cin, W*Cout)
    bands = jnp.stack([_banded(params["w2_hwio"], w, di)
                       for di in range(3)]).astype(cdt)           # (3, W*Co, W*Co)

    cparams = pltpu.CompilerParams(dimension_semantics=("parallel",),
                                   vmem_limit_bytes=32 * 1024 * 1024)
    row_in_spec = pl.BlockSpec((tile_rows, w * cin), lambda i: (i, 0))
    row_out_spec = pl.BlockSpec((tile_rows, wc), lambda i: (i, 0))
    stat_spec = pl.BlockSpec((1, 2, wc), lambda i: (i, 0, 0))
    vec_spec = pl.BlockSpec((1, wc), lambda i: (0, 0))            # VMEM-resident

    # ---- Pass 1: conv1x1 + BN1 partial stats ------------------------------- #
    y2d, st1 = pl.pallas_call(
        functools.partial(_pass1_kernel, cdt=cdt),
        grid=(nt,),
        in_specs=[row_in_spec,
                  pl.BlockSpec((w * cin, wc), lambda i: (0, 0))],  # weight resident
        out_specs=[row_out_spec, stat_spec],
        out_shape=[jax.ShapeDtypeStruct((rows, wc), cdt),
                   jax.ShapeDtypeStruct((nt, 2, wc), jnp.float32)],
        compiler_params=cparams,
    )(x2d, bd1)

    count = rows * w  # N*H*W pixels per channel
    sc1, sh1 = _bn_affine(st1, params["g1"], params["beta1"], w, cout, count)

    # ---- Pass 2: BN1 + ReLU + banded 3x3 conv + BN2 partial stats ----------- #
    z2d, st2 = pl.pallas_call(
        functools.partial(_pass2_kernel, h=h, cdt=cdt),
        grid=(nt,),
        in_specs=[row_out_spec, vec_spec, vec_spec,
                  pl.BlockSpec((3, wc, wc), lambda i: (0, 0, 0))],  # weights resident
        out_specs=[row_out_spec, stat_spec],
        out_shape=[jax.ShapeDtypeStruct((rows, wc), cdt),
                   jax.ShapeDtypeStruct((nt, 2, wc), jnp.float32)],
        compiler_params=cparams,
    )(y2d, sc1, sh1, bands)

    sc2, sh2 = _bn_affine(st2, params["g2"], params["beta2"], w, cout, count)

    # ---- Pass 3: BN2 affine (+ residual + ReLU) ----------------------------- #
    in_specs = [row_out_spec]
    args = [z2d]
    if res:
        in_specs.append(row_in_spec)
        args.append(x2d)
    in_specs += [vec_spec, vec_spec]
    args += [sc2, sh2]
    out2d = pl.pallas_call(
        functools.partial(_pass3_kernel, res=res),
        grid=(nt,),
        in_specs=in_specs,
        out_specs=row_out_spec,
        out_shape=jax.ShapeDtypeStruct((rows, wc), jnp.float32),
        compiler_params=cparams,
    )(*args)
    return out2d


def block_forward(x_nchw, params, *, res=True, stride=1,
                  compute_dtype=jnp.bfloat16, tile_rows=None):
    """Forward pass of `block`. Input/output are NCHW like PyTorch."""
    if stride != 1:
        # TODO(synk): stride>1 (subsampled 3x3 conv output) not implemented.
        raise NotImplementedError("only stride=1 is implemented")
    n, cin, h, w = x_nchw.shape
    cout = params["w1"].shape[1]
    # NCHW -> NHWC -> folded (N*H, W*Cin).  In a full network keep the folded
    # layout between blocks (block_forward_folded) so this is paid once.
    x2d = jnp.transpose(x_nchw, (0, 2, 3, 1)).astype(jnp.float32).reshape(n * h, w * cin)
    out2d = block_forward_folded(x2d, params, n=n, h=h, w=w, res=res,
                                 compute_dtype=compute_dtype, tile_rows=tile_rows)
    out = out2d.reshape(n, h, w, cout)
    return jnp.transpose(out, (0, 3, 1, 2))


# --------------------------------------------------------------------------- #
# Parameters & pure-JAX reference (PyTorch semantics, incl. conv biases)
# --------------------------------------------------------------------------- #
def init_params(cin, cout, key):
    k1, k2, k3, k4 = jax.random.split(key, 4)
    w1 = jax.random.normal(k1, (cin, cout), jnp.float32) * 0.1        # 1x1 conv (Cin, Cout)
    b1 = jax.random.normal(k2, (1, cout), jnp.float32) * 0.1
    w2_hwio = jax.random.normal(k3, (3, 3, cout, cout), jnp.float32) * 0.1
    b2 = jax.random.normal(k4, (1, cout), jnp.float32) * 0.1
    ones = jnp.ones((1, cout), jnp.float32)
    zeros = jnp.zeros((1, cout), jnp.float32)
    return {"w1": w1, "b1": b1, "g1": ones, "beta1": zeros,
            "w2_hwio": w2_hwio, "b2": b2, "g2": ones, "beta2": zeros}


def _ref_forward(x_nchw, params, *, res=True):
    x = jnp.transpose(x_nchw, (0, 2, 3, 1)).astype(jnp.float32)
    b = lambda v: v.reshape(1, 1, 1, -1)
    y = jnp.einsum("nhwc,cd->nhwd", x, params["w1"]) + b(params["b1"])
    m = y.mean(axis=(0, 1, 2), keepdims=True)
    v = ((y - m) ** 2).mean(axis=(0, 1, 2), keepdims=True)
    y = (y - m) / jnp.sqrt(v + _EPS) * b(params["g1"]) + b(params["beta1"])
    y = jnp.maximum(y, 0.0)
    z = lax.conv_general_dilated(y, params["w2_hwio"], (1, 1), "SAME",
                                 dimension_numbers=("NHWC", "HWIO", "NHWC"))
    z = z + b(params["b2"])
    m2 = z.mean(axis=(0, 1, 2), keepdims=True)
    v2 = ((z - m2) ** 2).mean(axis=(0, 1, 2), keepdims=True)
    z = (z - m2) / jnp.sqrt(v2 + _EPS) * b(params["g2"]) + b(params["beta2"])
    if res:
        z = jnp.maximum(z + x, 0.0)
    return jnp.transpose(z, (0, 3, 1, 2))


if __name__ == "__main__":
    key = jax.random.PRNGKey(0)
    kp, kx = jax.random.split(key)

    # W * C = 16 * 8 = 128 -> folded layout exactly fills the 128-wide lane axis.
    N, C, H, W = 2, 8, 16, 16
    params = init_params(C, C, kp)
    x = jax.random.normal(kx, (N, C, H, W), jnp.float32)   # NCHW, like PyTorch

    ref = jax.block_until_ready(_ref_forward(x, params, res=True))

    # f32 MXU path, 2 row tiles (exercises the grid / multi-pass BN) -> tight check.
    out_f32 = jax.block_until_ready(
        block_forward(x, params, res=True, stride=1,
                      compute_dtype=jnp.float32, tile_rows=H))
    assert out_f32.shape == (N, C, H, W)
    err_f32 = float(jnp.max(jnp.abs(out_f32 - ref)))
    assert err_f32 < 5e-3, f"f32 mismatch vs reference: {err_f32}"

    # bf16 MXU path (default, per perf review), auto tile size -> loose check.
    out_bf16 = jax.block_until_ready(block_forward(x, params, res=True, stride=1))
    assert out_bf16.shape == (N, C, H, W)
    err_bf16 = float(jnp.max(jnp.abs(out_bf16 - ref)))
    assert err_bf16 < 1e-1, f"bf16 mismatch vs reference: {err_bf16}"

    print("KERNEL_OK")
</pallas_src>

<mosaic_0001>
module attributes {stable_mosaic.version = 11 : i64} {
  func.func @_pass1_kernel(%arg0: i32, %arg1: memref<16x128xf32, #tpu.memory_space<vmem>>, %arg2: memref<128x128xf32, #tpu.memory_space<vmem>>, %arg3: memref<16x128xf32, #tpu.memory_space<vmem>>, %arg4: memref<1x2x128xf32, #tpu.memory_space<vmem>>) attributes {dimension_semantics = [#tpu.dimension_semantics<parallel>], iteration_bounds = array<i64: 2>, scalar_prefetch = 0 : i64, scratch_operands = 0 : i64, tpu.core_type = #tpu.core_type<tc>, window_params = [{transform_indices = @transform_0, window_bounds = array<i64: 16, 128>}, {pipeline_mode = #tpu.pipeline_mode<synchronous>, transform_indices = @transform_1, window_bounds = array<i64: 128, 128>}, {transform_indices = @transform_2, window_bounds = array<i64: 16, 128>}, {transform_indices = @transform_3, window_bounds = array<i64: 1, 2, 128>}]} {
    %c0 = arith.constant 0 : index
    %c0_0 = arith.constant 0 : index
    %0 = vector.load %arg1[%c0, %c0_0] : memref<16x128xf32, #tpu.memory_space<vmem>>, vector<16x128xf32>
    %c0_1 = arith.constant 0 : index
    %c0_2 = arith.constant 0 : index
    %1 = vector.load %arg2[%c0_1, %c0_2] : memref<128x128xf32, #tpu.memory_space<vmem>>, vector<128x128xf32>
    %cst = arith.constant dense<0.000000e+00> : vector<16x128xf32>
    %2 = tpu.matmul %0, %1, %cst {dimension_numbers = #tpu.dot_dimension_numbers<[1], [0], [0], [1], [0, 0, 1, 1], [], []>} : vector<16x128xf32>, vector<128x128xf32>, vector<16x128xf32> -> vector<16x128xf32>
    %c0_3 = arith.constant 0 : index
    %c0_4 = arith.constant 0 : index
    %3 = vector.load %arg3[%c0_3, %c0_4] : memref<16x128xf32, #tpu.memory_space<vmem>>, vector<16x128xf32>
    tpu.vector_store %arg3[%c0_3, %c0_4], %2 {strides = array<i32>} : memref<16x128xf32, #tpu.memory_space<vmem>>, vector<16x128xf32>,
    %cst_5 = arith.constant dense<0.000000e+00> : vector<128xf32>
    %4 = vector.multi_reduction <add>, %2, %cst_5 [0] : vector<16x128xf32> to vector<128xf32>
    %5 = vector.shape_cast %4 : vector<128xf32> to vector<1x128xf32>
    %c0_6 = arith.constant 0 : index
    %c0_7 = arith.constant 0 : index
    %c0_8 = arith.constant 0 : index
    %6 = vector.load %arg4[%c0_6, %c0_7, %c0_8] : memref<1x2x128xf32, #tpu.memory_space<vmem>>, vector<1x1x128xf32>
    %7 = vector.shape_cast %6 : vector<1x1x128xf32> to vector<1x128xf32>
    %8 = vector.shape_cast %5 : vector<1x128xf32> to vector<1x1x128xf32>
    tpu.vector_store %arg4[%c0_6, %c0_7, %c0_8], %8 {strides = array<i32>} : memref<1x2x128xf32, #tpu.memory_space<vmem>>, vector<1x1x128xf32>,
    %9 = arith.mulf %2, %2 : vector<16x128xf32>
    %cst_9 = arith.constant dense<0.000000e+00> : vector<128xf32>
    %10 = vector.multi_reduction <add>, %9, %cst_9 [0] : vector<16x128xf32> to vector<128xf32>
    %11 = vector.shape_cast %10 : vector<128xf32> to vector<1x128xf32>
    %c0_10 = arith.constant 0 : index
    %c1 = arith.constant 1 : index
    %c0_11 = arith.constant 0 : index
    %12 = vector.load %arg4[%c0_10, %c1, %c0_11] : memref<1x2x128xf32, #tpu.memory_space<vmem>>, vector<1x1x128xf32>
    %13 = vector.shape_cast %12 : vector<1x1x128xf32> to vector<1x128xf32>
    %14 = vector.shape_cast %11 : vector<1x128xf32> to vector<1x1x128xf32>
    tpu.vector_store %arg4[%c0_10, %c1, %c0_11], %14 {strides = array<i32>} : memref<1x2x128xf32, #tpu.memory_space<vmem>>, vector<1x1x128xf32>,
    return
  }
  func.func @transform_0(%arg0: i32) -> (i32, i32) {
    %c0_i32 = arith.constant 0 : i32
    %c0_i32_0 = arith.constant 0 : i32
    return %arg0, %c0_i32 : i32, i32
  }
  func.func @transform_1(%arg0: i32) -> (i32, i32) {
    %c0_i32 = arith.constant 0 : i32
    %c0_i32_0 = arith.constant 0 : i32
    %c0_i32_1 = arith.constant 0 : i32
    return %c0_i32, %c0_i32_0 : i32, i32
  }
  func.func @transform_2(%arg0: i32) -> (i32, i32) {
    %c0_i32 = arith.constant 0 : i32
    %c0_i32_0 = arith.constant 0 : i32
    return %arg0, %c0_i32 : i32, i32
  }
  func.func @transform_3(%arg0: i32) -> (i32, i32, i32) {
    %c0_i32 = arith.constant 0 : i32
    %c0_i32_0 = arith.constant 0 : i32
    %c0_i32_1 = arith.constant 0 : i32
    return %arg0, %c0_i32, %c0_i32_0 : i32, i32, i32
  }
}

</mosaic_0001>

<llo_original>
// kernel: tpu_custom_call.1
$region0: #{tpu_custom_call.1}
  #allocation0 [shape = 'u32[]', space=smem, size = 0x4, offset = 0x4, fixed_abs, tag = 'smem constant byte address 0x4 - core index']
  #allocation1 [shape = 'u32[144,128]{1,0:T(1,128)}', space=vmem, size = 0x12000, scoped, tag = 'internal scratch']
  %s0 = inlined_call_operand.hbm [shape: f32[32,128], index: 0, kind: input, shape index: {}]
  %s1 = inlined_call_operand.hbm [shape: f32[128,128], index: 1, kind: input, shape index: {}]
  %s2 = inlined_call_operand.hbm [shape: f32[32,128], index: 2, kind: output, shape index: {0}]
  %s3 = inlined_call_operand.hbm [shape: f32[2,2,128], index: 3, kind: output, shape index: {1}]
  %4 = xla_tuple %s2, %s3
  %s5 = sld [smem:[#allocation0]]
  $region57: #{tpu_custom_call.1} parent=0
    _
  %s7 = ssub.s32 1, %s5
  %s8 = scalar_select 0, %s7, %s5
  $region1: #{tpu_custom_call.1} parent=0
    #allocation2 [shape = 'u8[16384]{0}', space=vmem, size = 0x4000, scoped, tag = 'input window, operand 0']
    #allocation3 [shape = 's32[2]{0}', space=sflag, size = 0x8, scoped, tag = 'scoped memory for tpu_custom_call.1']
    #allocation4 [shape = 's32[2]{0}', space=sflag, size = 0x8, scoped, tag = 'scoped memory for tpu_custom_call.1']
    #allocation5 [shape = 'u8[65536]{0}', space=vmem, size = 0x10000, scoped, tag = 'input window, operand 1, single buffered']
    #allocation6 [shape = 's32[1]{0}', space=sflag, size = 0x4, scoped, tag = 'scoped memory for tpu_custom_call.1']
    #allocation7 [shape = 'u8[16384]{0}', space=vmem, size = 0x4000, scoped, tag = 'output window, operand 0']
    #allocation8 [shape = 'u8[2048]{0}', space=vmem, size = 0x800, scoped, tag = 'output window, operand 1']
    #allocation9 [shape = 's32[2]{0}', space=sflag, size = 0x8, scoped, tag = 'scoped memory for tpu_custom_call.1']
    %9 = vsyncpa [#allocation3], 0
    %s10 = scalar_lea.sflag [#allocation3], 1
    %11 = vsyncpa %s10, 0
    %12 = vsyncpa [#allocation6], 0
    %13 = vsyncpa [#allocation4], 0
    %s14 = scalar_lea.sflag [#allocation4], 1
    %15 = vsyncpa %s14, 0
    %16 = vsyncpa [#allocation9], 0
    %s17 = scalar_lea.sflag [#allocation9], 1
    %18 = vsyncpa %s17, 0
    loop: start=0, step=1, limit=4
    $region2: #{tpu_custom_call.1} parent=1 // loop_pre_header
      _
    $region3: #{tpu_custom_call.1} parent=1 // loop_header
      %s20 = sphi 0, %s24
      %p21 = scmp.ge.s32.totalorder %s20, 4
      %s30 = sphi 0, %s32
      %s33 = sphi 0, %s30
      %s34 = sphi 0, %s33
      %s50 = sphi 0, %s34
      %s54 = sphi 0, %s54
      %s56 = sphi 0, %s54
      %s57 = sphi 0, %s56
      %s71 = sphi 0, %s57
      %s77 = sphi 0, %s79
      %s80 = sphi 0, %s77
      %s81 = sphi 0, %s80
      %s97 = sphi 0, %s81
      %s103 = sphi 0, %s105
      %s106 = sphi 0, %s103
      %s107 = sphi 0, %s106
      %s123 = sphi 0, %s107
    $region4: #{tpu_custom_call.1} parent=1 // loop_header_branch
      %23 = sbr.rel (%p21) target = $region8
    $region5: #{tpu_custom_call.1} parent=1 // loop_body
      %s25 = ssub.s32 %s20, 1
      %s26 = ssub.s32 %s20, 2
      %s27 = sadd.s32 %s20, 1
      %s28 = ssub.s32 %s20, %s27
      %p29 = scmp.eq.s32.totalorder %s28, 0
      %s31 = sadd.s32 %s30, 1
      %s32 = scalar_select %p29, %s30, %s31
      %p35 = pneg %p29
      %p36 = scmp.eq.s32.totalorder %s20, 1
      %p37 = por %p35, %p36
      %p38 = scmp.ne.s32.totalorder %s30, %s33
      %p39 = scmp.eq.s32.totalorder %s20, 0
      %p40 = por %p38, %p39
      %p41 = scmp.ne.s32.totalorder %s30, %s33
      %p42 = scmp.eq.s32.totalorder %s25, 1
      %p43 = por %p41, %p42
      %p44 = scmp.ne.s32.totalorder %s33, %s34
      %p45 = scmp.eq.s32.totalorder %s25, 0
      %p46 = por %p44, %p45
      %p47 = scmp.ne.s32.totalorder %s33, %s34
      %p48 = scmp.eq.s32.totalorder %s26, 1
      %p49 = por %p47, %p48
      %p51 = scmp.ne.s32.totalorder %s34, %s50
      %p52 = scmp.eq.s32.totalorder %s26, 0
      %p53 = por %p51, %p52
      %s55 = sadd.s32 %s54, 1
      %p58 = scmp.eq.s32.totalorder %s20, 1
      %p59 = scmp.ne.s32.totalorder %s54, %s56
      %p60 = scmp.eq.s32.totalorder %s20, 0
      %p61 = por %p59, %p60
      %p62 = scmp.ne.s32.totalorder %s54, %s56
      %p63 = scmp.eq.s32.totalorder %s25, 1
      %p64 = por %p62, %p63
      %p65 = scmp.ne.s32.totalorder %s56, %s57
      %p66 = scmp.eq.s32.totalorder %s25, 0
      %p67 = por %p65, %p66
      %p68 = scmp.ne.s32.totalorder %s56, %s57
      %p69 = scmp.eq.s32.totalorder %s26, 1
      %p70 = por %p68, %p69
      %p72 = scmp.ne.s32.totalorder %s57, %s71
      %p73 = scmp.eq.s32.totalorder %s26, 0
      %p74 = por %p72, %p73
      %s75 = ssub.s32 %s20, %s27
      %p76 = scmp.eq.s32.totalorder %s75, 0
      %s78 = sadd.s32 %s77, 1
      %s79 = scalar_select %p76, %s77, %s78
      %p82 = pneg %p76
      %p83 = scmp.eq.s32.totalorder %s20, 1
      %p84 = por %p82, %p83
      %p85 = scmp.ne.s32.totalorder %s77, %s80
      %p86 = scmp.eq.s32.totalorder %s20, 0
      %p87 = por %p85, %p86
      %p88 = scmp.ne.s32.totalorder %s77, %s80
      %p89 = scmp.eq.s32.totalorder %s25, 1
      %p90 = por %p88, %p89
      %p91 = scmp.ne.s32.totalorder %s80, %s81
      %p92 = scmp.eq.s32.totalorder %s25, 0
      %p93 = por %p91, %p92
      %p94 = scmp.ne.s32.totalorder %s80, %s81
      %p95 = scmp.eq.s32.totalorder %s26, 1
      %p96 = por %p94, %p95
      %p98 = scmp.ne.s32.totalorder %s81, %s97
      %p99 = scmp.eq.s32.totalorder %s26, 0
      %p100 = por %p98, %p99
      %s101 = ssub.s32 %s20, %s27
      %p102 = scmp.eq.s32.totalorder %s101, 0
      %s104 = sadd.s32 %s103, 1
      %s105 = scalar_select %p102, %s103, %s104
      %p108 = pneg %p102
      %p109 = scmp.eq.s32.totalorder %s20, 1
      %p110 = por %p108, %p109
      %p111 = scmp.ne.s32.totalorder %s103, %s106
      %p112 = scmp.eq.s32.totalorder %s20, 0
      %p113 = por %p111, %p112
      %p114 = scmp.ne.s32.totalorder %s103, %s106
      %p115 = scmp.eq.s32.totalorder %s25, 1
      %p116 = por %p114, %p115
      %p117 = scmp.ne.s32.totalorder %s106, %s107
      %p118 = scmp.eq.s32.totalorder %s25, 0
      %p119 = por %p117, %p118
      %p120 = scmp.ne.s32.totalorder %s106, %s107
      %p121 = scmp.eq.s32.totalorder %s26, 1
      %p122 = por %p120, %p121
      %p124 = scmp.ne.s32.totalorder %s107, %s123
      %p125 = scmp.eq.s32.totalorder %s26, 0
      %p126 = por %p124, %p125
      %p127 = scmp.le.s32.totalorder 1, %s20
      %p128 = scmp.lt.s32.totalorder %s20, 3
      %p129 = pnand %p127, %p128
      %p130 = pneg %p129
      // Predicated region
      $region9: #{tpu_custom_call.1} parent=5 // pred_check
        _
      $region10: #{tpu_custom_call.1} parent=5 // pred_check_branch
        %132 = sbr.rel (%p129) target = $region12
      $region11: #{tpu_custom_call.1} parent=5 // pred_region
        %s133 = ssub.s32 %s20, 1
        // Predicated region
        $region13: #{tpu_custom_call.1} parent=11 // pred_check
          %p134 = pneg %p67
        $region14: #{tpu_custom_call.1} parent=11 // pred_check_branch
          %136 = sbr.rel (%p134) target = $region16
        $region15: #{tpu_custom_call.1} parent=11 // pred_region
          %s138 = ssub.s32 2048, 2048
          %139 = vsyncadd [#allocation6], %s138
          %s140 = sshll.u32 [#allocation5], 4
          %s141 = int_to_ptr.vmem [resolvable:$true] %s140
          %146 = dma.hbm_to_vmem [thread:$0]  %s1, 2048, %s141, [#allocation6], 128, 128, 8
        $region16: #{tpu_custom_call.1} parent=11 // pred_fallthru
          _
      $region12: #{tpu_custom_call.1} parent=5 // pred_fallthru
        _
      %p147 = scmp.lt.s32.totalorder %s20, 2
      // Predicated region
      $region17: #{tpu_custom_call.1} parent=5 // pred_check
        %p148 = pneg %p147
      $region18: #{tpu_custom_call.1} parent=5 // pred_check_branch
        %150 = sbr.rel (%p148) target = $region20
      $region19: #{tpu_custom_call.1} parent=5 // pred_region
        // Predicated region
        $region21: #{tpu_custom_call.1} parent=19 // pred_check
          %p151 = pneg %p40
        $region22: #{tpu_custom_call.1} parent=19 // pred_check_branch
          %153 = sbr.rel (%p151) target = $region24
        $region23: #{tpu_custom_call.1} parent=19 // pred_region
          %s154 = sand.u32 %s30, 1
          %s155 = scalar_lea.sflag [#allocation3], %s154
          %s156 = sand.u32 %s30, 1
          %s157 = smul.addr %s156, 16
          %s158 = scalar_lea.vmem [#allocation2], %s157
          %s159 = smul.u32 2, %s20
          %s161 = ssub.s32 256, 256
          %162 = vsyncadd %s155, %s161
          %s163 = smul.addr %s159, 128
          %s164 = scalar_lea.hbm %s0, %s163
          %s165 = sshll.u32 %s158, 4
          %s166 = int_to_ptr.vmem [resolvable:$true] %s165
          %171 = dma.hbm_to_vmem [thread:$0]  %s164, 256, %s166, %s155, 128, 128, 8
        $region24: #{tpu_custom_call.1} parent=19 // pred_fallthru
          _
      $region20: #{tpu_custom_call.1} parent=5 // pred_fallthru
        _
      %p172 = scmp.le.s32.totalorder 1, %s20
      %p173 = scmp.lt.s32.totalorder %s20, 3
      %p174 = pnand %p172, %p173
      %p175 = pneg %p174
      // Predicated region
      $region25: #{tpu_custom_call.1} parent=5 // pred_check
        _
      $region26: #{tpu_custom_call.1} parent=5 // pred_check_branch
        %177 = sbr.rel (%p174) target = $region28
      $region27: #{tpu_custom_call.1} parent=5 // pred_region
        %s178 = ssub.s32 %s20, 1
        %s179 = sand.u32 %s33, 1
        %s180 = scalar_lea.sflag [#allocation3], %s179
        %s181 = sand.u32 %s33, 1
        %s182 = smul.addr %s181, 16
        %s183 = scalar_lea.vmem [#allocation2], %s182
        // Predicated region
        $region29: #{tpu_custom_call.1} parent=27 // pred_check
          %p184 = pneg %p46
        $region30: #{tpu_custom_call.1} parent=27 // pred_check_branch
          %186 = sbr.rel (%p184) target = $region32
        $region31: #{tpu_custom_call.1} parent=27 // pred_region
          %187 = dma.done %s180, 256
        $region32: #{tpu_custom_call.1} parent=27 // pred_fallthru
          _
        // Predicated region
        $region33: #{tpu_custom_call.1} parent=27 // pred_check
          %p188 = pneg %p67
        $region34: #{tpu_custom_call.1} parent=27 // pred_check_branch
          %190 = sbr.rel (%p188) target = $region36
        $region35: #{tpu_custom_call.1} parent=27 // pred_region
          %191 = dma.done [#allocation6], 2048
        $region36: #{tpu_custom_call.1} parent=27 // pred_fallthru
          _
        %s192 = sand.u32 %s33, 1
        %s193 = scalar_lea.sflag [#allocation3], %s192
        %s194 = sand.u32 %s33, 1
        %s195 = smul.addr %s194, 16
        %s196 = scalar_lea.vmem [#allocation2], %s195
        %p197 = pneg %p46
        %p198 = pneg %p43
        %p199 = pneg %p67
        %p200 = pneg %p64
        %p201 = pneg %p93
        %p202 = pneg %p90
        %s203 = sand.u32 %s80, 1
        %s204 = scalar_lea.sflag [#allocation4], %s203
        %s205 = sand.u32 %s80, 1
        %s206 = smul.addr %s205, 16
        %s207 = scalar_lea.vmem [#allocation7], %s206
        %p208 = pneg %p119
        %p209 = pneg %p116
        %s210 = sand.u32 %s106, 1
        %s211 = scalar_lea.sflag [#allocation9], %s210
        %s212 = sand.u32 %s106, 1
        %s213 = smul.addr %s212, 2
        %s214 = scalar_lea.vmem [#allocation8], %s213
        %s215 = smul.u32 2, %s25
        %s216 = smul.u32 2, %s25
        %v217 = vld [vmem:[%s183] sm:$0xff]
        %v218 = vld [vmem:[%s183 + $0x8] sm:$0xff]
        %v219 = vld [vmem:[#allocation5] sm:$0xff]
        %v220 = vld [vmem:[#allocation5 + $0x8] sm:$0xff]
        %v221 = vld [vmem:[#allocation5 + $0x10] sm:$0xff]
        %v222 = vld [vmem:[#allocation5 + $0x18] sm:$0xff]
        %v223 = vld [vmem:[#allocation5 + $0x20] sm:$0xff]
        %v224 = vld [vmem:[#allocation5 + $0x28] sm:$0xff]
        %v225 = vld [vmem:[#allocation5 + $0x30] sm:$0xff]
        %v226 = vld [vmem:[#allocation5 + $0x38] sm:$0xff]
        %v227 = vld [vmem:[#allocation5 + $0x40] sm:$0xff]
        %v228 = vld [vmem:[#allocation5 + $0x48] sm:$0xff]
        %v229 = vld [vmem:[#allocation5 + $0x50] sm:$0xff]
        %v230 = vld [vmem:[#allocation5 + $0x58] sm:$0xff]
        %v231 = vld [vmem:[#allocation5 + $0x60] sm:$0xff]
        %v232 = vld [vmem:[#allocation5 + $0x68] sm:$0xff]
        %v233 = vld [vmem:[#allocation5 + $0x70] sm:$0xff]
        %v234 = vld [vmem:[#allocation5 + $0x78] sm:$0xff]
        %235 = vmatprep.subr.mxu0 0.0
        %236 = vmatpush1.msra.mxu0 %v234
        %237 = vmatprep.subr.mxu0 0.0
        %238 = vmatpush1.msra.mxu0 %v233
        %239 = vmatprep.subr.mxu0 0.0
        %240 = vmatpush1.msra.mxu0 %v232
        %241 = vmatprep.subr.mxu0 0.0
        %242 = vmatpush1.msra.mxu0 %v231
        %243 = vmatprep.subr.mxu0 0.0
        %244 = vmatpush1.msra.mxu0 %v230
        %245 = vmatprep.subr.mxu0 0.0
        %246 = vmatpush1.msra.mxu0 %v229
        %247 = vmatprep.subr.mxu0 0.0
        %248 = vmatpush1.msra.mxu0 %v228
        %249 = vmatprep.subr.mxu0 0.0
        %250 = vmatpush1.msra.mxu0 %v227
        %251 = vmatprep.subr.mxu0 0.0
        %252 = vmatpush1.msra.mxu0 %v226
        %253 = vmatprep.subr.mxu0 0.0
        %254 = vmatpush1.msra.mxu0 %v225
        %255 = vmatprep.subr.mxu0 0.0
        %256 = vmatpush1.msra.mxu0 %v224
        %257 = vmatprep.subr.mxu0 0.0
        %258 = vmatpush1.msra.mxu0 %v223
        %259 = vmatprep.subr.mxu0 0.0
        %260 = vmatpush1.msra.mxu0 %v222
        %261 = vmatprep.subr.mxu0 0.0
        %262 = vmatpush1.msra.mxu0 %v221
        %263 = vmatprep.subr.mxu0 0.0
        %264 = vmatpush1.msra.mxu0 %v220
        %265 = vmatprep.subr.mxu0 0.0
        %266 = vmatpush1.msra.mxu0 %v219
        %267 = vmatprep.subr.mxu0 0.0
        %268 = vmatpush2.msra.mxu0 0.0
        %269 = vmatprep.subr.mxu0 0.0
        %270 = vmatpush2.msra.mxu0 0.0
        %271 = vmatprep.subr.mxu0 0.0
        %272 = vmatpush2.msra.mxu0 0.0
        %273 = vmatprep.subr.mxu0 0.0
        %274 = vmatpush2.msra.mxu0 0.0
        %275 = vmatprep.subr.mxu0 0.0
        %276 = vmatpush2.msra.mxu0 0.0
        %277 = vmatprep.subr.mxu0 0.0
        %278 = vmatpush2.msra.mxu0 0.0
        %279 = vmatprep.subr.mxu0 0.0
        %280 = vmatpush2.msra.mxu0 0.0
        %281 = vmatprep.subr.mxu0 0.0
        %282 = vmatpush2.msra.mxu0 0.0
        %283 = vmatprep.subr.mxu0 0.0
        %284 = vmatpush2.msra.mxu0 0.0
        %285 = vmatprep.subr.mxu0 0.0
        %286 = vmatpush2.msra.mxu0 0.0
        %287 = vmatprep.subr.mxu0 0.0
        %288 = vmatpush2.msra.mxu0 0.0
        %289 = vmatprep.subr.mxu0 0.0
        %290 = vmatpush2.msra.mxu0 0.0
        %291 = vmatprep.subr.mxu0 0.0
        %292 = vmatpush2.msra.mxu0 0.0
        %293 = vmatprep.subr.mxu0 0.0
        %294 = vmatpush2.msra.mxu0 0.0
        %295 = vmatprep.subr.mxu0 0.0
        %296 = vmatpush2.msra.mxu0 0.0
        %297 = vmatprep.subr.mxu0 0.0
        %298 = vmatpush2.msra.mxu0 0.0
        %299 = vmatprep.mubr.f32.mxu0 0.0
        %300 = vmatmul.mubr.f32.gmra.mxu0 %v217
        %v301 = vpop.f32.mrf.mxu0
        %v302 = vadd.f32 0.0, %v301
        %v303 = vpop.f32.mrf.mxu0
        %304 = vmatprep.mubr.f32.mxu0 0.0
        %305 = vmatmul.mubr.f32.gmra.mxu0 %v218
        %v306 = vpop.f32.mrf.mxu0
        %v307 = vadd.f32 0.0, %v306
        %v308 = vpop.f32.mrf.mxu0
        %309 = vdwg.mxu0
        %310 = vst [vmem:[%s207] sm:$0xff] %v302
        %311 = vst [vmem:[%s207 + $0x8] sm:$0xff] %v307
        %v312 = vadd.f32 %v302, %v307
        %v313 = vrot.slane %v312, 4
        %v314 = vadd.f32 %v312, %v313
        %v315 = vrot.slane %v314, 2
        %v316 = vadd.f32 %v314, %v315
        %v317 = vrot.slane %v316, 1
        %v318 = vadd.f32 %v316, %v317
        %319 = vst [vmem:[%s214] sm:$0x1] %v318
        %v320 = vmul.f32 %v302, %v302
        %v321 = vmul.f32 %v307, %v307
        %v322 = vadd.f32 %v320, %v321
        %v323 = vrot.slane %v322, 4
        %v324 = vadd.f32 %v322, %v323
        %v325 = vrot.slane %v324, 2
        %v326 = vadd.f32 %v324, %v325
        %v327 = vrot.slane %v326, 1
        %v328 = vadd.f32 %v326, %v327
        %329 = vst [vmem:[%s214 + $0x1] sm:$0x1] %v328
        %s330 = sand.u32 %s80, 1
        %s331 = scalar_lea.sflag [#allocation4], %s330
        %s332 = sand.u32 %s80, 1
        %s333 = smul.addr %s332, 16
        %s334 = scalar_lea.vmem [#allocation7], %s333
        %s335 = sand.u32 %s106, 1
        %s336 = scalar_lea.sflag [#allocation9], %s335
        %s337 = sand.u32 %s106, 1
        %s338 = smul.addr %s337, 2
        %s339 = scalar_lea.vmem [#allocation8], %s338
        // Predicated region
        $region37: #{tpu_custom_call.1} parent=27 // pred_check
          %p340 = pneg %p90
        $region38: #{tpu_custom_call.1} parent=27 // pred_check_branch
          %342 = sbr.rel (%p340) target = $region40
        $region39: #{tpu_custom_call.1} parent=27 // pred_region
          %s343 = smul.u32 2, %s25
          %s345 = ssub.s32 256, 256
          %346 = vsyncadd %s331, %s345
          %s347 = smul.addr %s343, 128
          %s348 = scalar_lea.hbm %s2, %s347
          %s349 = sshll.u32 %s334, 4
          %s350 = int_to_ptr.vmem [resolvable:$true] %s349
          %355 = dma.vmem_to_hbm [thread:$0]  %s350, 256, %s348, %s331, 128, 128, 8
        $region40: #{tpu_custom_call.1} parent=27 // pred_fallthru
          _
        // Predicated region
        $region41: #{tpu_custom_call.1} parent=27 // pred_check
          %p356 = pneg %p116
        $region42: #{tpu_custom_call.1} parent=27 // pred_check_branch
          %358 = sbr.rel (%p356) target = $region44
        $region43: #{tpu_custom_call.1} parent=27 // pred_region
          %s360 = ssub.s32 32, 32
          %361 = vsyncadd %s336, %s360
          %s362 = smul.addr %s25, 32
          %s363 = scalar_lea.hbm %s3, %s362
          %s365 = sshll.u32 %s339, 4
          %s366 = int_to_ptr.vmem [resolvable:$true] %s365
          %368 = dma.vmem_to_hbm [thread:$0]  %s366, 32, %s363, %s336
        $region44: #{tpu_custom_call.1} parent=27 // pred_fallthru
          _
      $region28: #{tpu_custom_call.1} parent=5 // pred_fallthru
        _
      %p369 = scmp.le.s32.totalorder 2, %s20
      // Predicated region
      $region45: #{tpu_custom_call.1} parent=5 // pred_check
        %p370 = pneg %p369
      $region46: #{tpu_custom_call.1} parent=5 // pred_check_branch
        %372 = sbr.rel (%p370) target = $region48
      $region47: #{tpu_custom_call.1} parent=5 // pred_region
        %s373 = ssub.s32 %s20, 2
        // Predicated region
        $region49: #{tpu_custom_call.1} parent=47 // pred_check
          %p374 = pneg %p96
        $region50: #{tpu_custom_call.1} parent=47 // pred_check_branch
          %376 = sbr.rel (%p374) target = $region52
        $region51: #{tpu_custom_call.1} parent=47 // pred_region
          %s377 = sand.u32 %s81, 1
          %s378 = scalar_lea.sflag [#allocation4], %s377
          %s379 = sand.u32 %s81, 1
          %s380 = smul.addr %s379, 16
          %s381 = scalar_lea.vmem [#allocation7], %s380
          %382 = dma.done %s378, 256
        $region52: #{tpu_custom_call.1} parent=47 // pred_fallthru
          _
        // Predicated region
        $region53: #{tpu_custom_call.1} parent=47 // pred_check
          %p383 = pneg %p122
        $region54: #{tpu_custom_call.1} parent=47 // pred_check_branch
          %385 = sbr.rel (%p383) target = $region56
        $region55: #{tpu_custom_call.1} parent=47 // pred_region
          %s386 = sand.u32 %s107, 1
          %s387 = scalar_lea.sflag [#allocation9], %s386
          %s388 = sand.u32 %s107, 1
          %s389 = smul.addr %s388, 2
          %s390 = scalar_lea.vmem [#allocation8], %s389
          %391 = dma.done %s387, 32
        $region56: #{tpu_custom_call.1} parent=47 // pred_fallthru
          _
      $region48: #{tpu_custom_call.1} parent=5 // pred_fallthru
        _
    $region6: #{tpu_custom_call.1} parent=1 // loop_footer
      %s24 = sadd.s32 1, %s20
    $region7: #{tpu_custom_call.1} parent=1 // loop_footer_branch
      %19 = sbr.rel target = $region3
    $region8: #{tpu_custom_call.1} parent=1 // loop_exit
      _
    %392 = vsyncpa [#allocation3], 1
    %s393 = scalar_lea.sflag [#allocation3], 1
    %394 = vsyncpa %s393, 1
    %395 = vsyncpa [#allocation6], 1
    %396 = vsyncpa [#allocation4], 1
    %s397 = scalar_lea.sflag [#allocation4], 1
    %398 = vsyncpa %s397, 1
    %399 = vsyncpa [#allocation9], 1
    %s400 = scalar_lea.sflag [#allocation9], 1
    %401 = vsyncpa %s400, 1

</llo_original>
